<compile_context>
chip_gen: v6e
topology: v6e:2x2x1
jax: 0.10.0
libtpu: 0.0.40
codegen_flags: <defaults>
</compile_context>

<pallas_src>
import functools

import jax
import jax.numpy as jnp
from jax.experimental import pallas as pl
from jax.experimental.pallas import tpu as pltpu

HIDDEN = 64
ACTION_SIZE = 20
OUT_LANES = 128          # lane-dense packed output width
V_COL = ACTION_SIZE      # column holding the (pre-tanh) value head output
NEG_MASK = -1e30         # finite "-inf": baked into padded bias lanes, avoids inf-inf


def _round_up(n, m):
    return (n + m - 1) // m * m


def chessnet_kernel(x_ref, w1_ref, b1_ref, w2_ref, b2_ref, w3p_ref, b3p_ref,
                    out_ref):
    # ---- layer 1 on the VPU: K=1 contraction == broadcast outer product ----
    x = x_ref[...]                                             # (TB, 1)  f32
    h1 = jnp.maximum(x * w1_ref[...] + b1_ref[...], 0.0)       # (TB, 64) f32

    # ---- layer 2 on the MXU (bf16 operands by default, f32 accumulation) ----
    h2 = jnp.dot(h1.astype(w2_ref.dtype), w2_ref[...],
                 preferred_element_type=jnp.float32) + b2_ref[...]
    h2 = jnp.maximum(h2, 0.0)                                  # (TB, 64) f32

    # ---- fused dense3 + dense4: one (TB,64)@(64,128) matmul ----
    # Padded lanes 21..127 carry NEG_MASK via b3p (zero weights), so they are
    # already "masked" for the softmax without any runtime iota/compare.
    z = jnp.dot(h2.astype(w3p_ref.dtype), w3p_ref[...],
                preferred_element_type=jnp.float32) + b3p_ref[...]  # (TB,128)

    col = jax.lax.broadcasted_iota(jnp.int32, z.shape, 1)
    is_v = col == V_COL                      # single runtime mask: value column

    # log_softmax over the 20 real logit columns.
    pi_masked = jnp.where(is_v, NEG_MASK, z)
    m = jnp.max(pi_masked, axis=-1, keepdims=True)
    sum_exp = jnp.sum(jnp.exp(pi_masked - m), axis=-1, keepdims=True)
    log_pi = z - (m + jnp.log(sum_exp))

    # column V_COL carries pi @ W4 + b4; apply tanh there, log_pi elsewhere.
    out = jnp.where(is_v, jnp.tanh(z), log_pi)
    out_ref[...] = out.astype(out_ref.dtype)


def pack_params(params, compute_dtype=jnp.bfloat16):
    """Fold dense4 into dense3, pad the fused weight/bias to 128 lanes and bake
    the padded-column softmax mask into the bias.

    compute_dtype=bf16 (default) is MXU-native on v6e/v7x and fine on v5e's
    4x128^2 bf16 MXUs; biases, the layer-1 VPU path and all epilogue math stay
    f32 (v5e has no bf16 VPU/EUP).
    """
    w3, b3, w4, b4 = params["w3"], params["b3"], params["w4"], params["b4"]
    w34 = jnp.concatenate([w3, w3 @ w4], axis=1)                # (64, 21)
    b34 = jnp.concatenate([b3, b3 @ w4 + b4], axis=1)           # (1, 21)
    w3p = jnp.zeros((HIDDEN, OUT_LANES), jnp.float32).at[:, :w34.shape[1]].set(w34)
    # Padded lanes 21..127 get NEG_MASK so exp() kills them with no runtime mask.
    b3p = jnp.full((1, OUT_LANES), NEG_MASK, jnp.float32).at[:, :b34.shape[1]].set(b34)
    return dict(
        w1=params["w1"].astype(jnp.float32),    # (1, 64), VPU path stays f32
        b1=params["b1"].astype(jnp.float32),    # (1, 64)
        w2=params["w2"].astype(compute_dtype),  # (64, 64)
        b2=params["b2"].astype(jnp.float32),    # (1, 64)
        w3p=w3p.astype(compute_dtype),          # (64, 128) fused + padded
        b3p=b3p,                                # (1, 128)  fused + padded + mask, f32
    )


def _tile_and_pad(batch, block_b):
    """Pick the batch tile: big enough to amortize per-step overhead, but capped
    at ceil(B/2) so there are >=2 'parallel' grid steps for v7x's two TCs."""
    b_aligned = _round_up(max(batch, 1), 8)
    if b_aligned >= 16:
        tb = min(block_b, _round_up(b_aligned // 2, 8))
    else:
        tb = b_aligned
    b_pad = _round_up(b_aligned, tb)
    return tb, b_pad


@functools.partial(jax.jit, static_argnames=("block_b", "out_dtype"))
def chessnet_forward_packed(x, packed, *, block_b=2048, out_dtype=jnp.float32):
    """Returns the packed (b_pad, 128) slab straight from the kernel:
    log_pi in columns 0..19, tanh(v) in column 20 (columns 21..127 are junk,
    rows >= B are padding). Consuming this slab directly avoids the extra HBM
    pass that the convenience wrapper's slices incur.
    """
    B = x.shape[0]
    tb, b_pad = _tile_and_pad(B, block_b)
    x = x.astype(jnp.float32)
    if b_pad != B:
        x = jnp.pad(x, ((0, b_pad - B), (0, 0)))

    weights = (packed["w1"], packed["b1"], packed["w2"], packed["b2"],
               packed["w3p"], packed["b3p"])
    # Weights/biases: full-array blocks with a constant index_map -> stay
    # resident in VMEM across grid steps.
    weight_specs = [pl.BlockSpec(w.shape, lambda i: (0, 0)) for w in weights]

    # VMEM budget. NOTE: the (tb, 1) x block lane-pads to 128 lanes in VMEM, so
    # both the x and out double buffers cost ~512 B/row each. Add a generous
    # allowance for whole-tile f32 intermediates (h1/h2/z/epilogue) + weights.
    io_bytes = 4 * tb * OUT_LANES * 4                      # x + out, double-buffered
    tmp_bytes = tb * 4 * (2 * HIDDEN + 6 * OUT_LANES)      # ~3.5 KB/row of temporaries
    vmem_limit = int(min(max(io_bytes + tmp_bytes + (6 << 20), 16 << 20), 48 << 20))

    flops = 2 * b_pad * (HIDDEN + HIDDEN * HIDDEN + HIDDEN * OUT_LANES)
    bytes_accessed = (x.size * 4
                      + b_pad * OUT_LANES * jnp.dtype(out_dtype).itemsize
                      + sum(w.size * w.dtype.itemsize for w in weights))
    cost = pl.CostEstimate(flops=int(flops),
                           transcendentals=int(b_pad * (OUT_LANES + 1)),
                           bytes_accessed=int(bytes_accessed))

    return pl.pallas_call(
        chessnet_kernel,
        out_shape=jax.ShapeDtypeStruct((b_pad, OUT_LANES), out_dtype),
        grid=(b_pad // tb,),
        in_specs=[pl.BlockSpec((tb, 1), lambda i: (i, 0))] + weight_specs,
        out_specs=pl.BlockSpec((tb, OUT_LANES), lambda i: (i, 0)),
        compiler_params=pltpu.CompilerParams(
            dimension_semantics=("parallel",),
            vmem_limit_bytes=vmem_limit),
        cost_estimate=cost,
    )(x, *weights)


@functools.partial(jax.jit, static_argnames=("block_b",))
def chessnet_forward(x, packed, *, block_b=2048):
    """Convenience API matching the PyTorch module: (log_softmax(pi), tanh(v)).

    The two slices below cost one extra XLA pass over the slab; for
    throughput-critical consumers use chessnet_forward_packed() directly.
    """
    out = chessnet_forward_packed(x, packed, block_b=block_b,
                                  out_dtype=jnp.float32)
    B = x.shape[0]
    log_pi = out[:B, :ACTION_SIZE]
    v = out[:B, V_COL:V_COL + 1]
    return log_pi, v


def init_params(key):
    """nn.Linear-style U(-1/sqrt(fan_in), 1/sqrt(fan_in)) init.

    Weights stored as (in_features, out_features); biases as (1, out_features).
    """
    def linear(key, fan_in, fan_out):
        kw, kb = jax.random.split(key)
        bound = 1.0 / jnp.sqrt(float(fan_in))
        w = jax.random.uniform(kw, (fan_in, fan_out), jnp.float32, -bound, bound)
        b = jax.random.uniform(kb, (1, fan_out), jnp.float32, -bound, bound)
        return w, b

    k1, k2, k3, k4 = jax.random.split(key, 4)
    w1, b1 = linear(k1, 1, HIDDEN)
    w2, b2 = linear(k2, HIDDEN, HIDDEN)
    # TODO(synk): the reference module re-creates dense3/dense4 with fresh
    # random weights on every forward() call; here they are initialized once.
    w3, b3 = linear(k3, HIDDEN, ACTION_SIZE)
    w4, b4 = linear(k4, ACTION_SIZE, 1)
    return dict(w1=w1, b1=b1, w2=w2, b2=b2, w3=w3, b3=b3, w4=w4, b4=b4)


def reference_forward(x, p):
    h1 = jnp.maximum(x @ p["w1"] + p["b1"], 0.0)
    h2 = jnp.maximum(h1 @ p["w2"] + p["b2"], 0.0)
    pi = h2 @ p["w3"] + p["b3"]
    log_pi = pi - jax.scipy.special.logsumexp(pi, axis=-1, keepdims=True)
    v = jnp.tanh(pi @ p["w4"] + p["b4"])
    return log_pi, v


if __name__ == "__main__":
    key = jax.random.PRNGKey(0)
    kx, kp = jax.random.split(key)

    B = 8  # ChessNet takes a single scalar feature per board sample
    x = jax.random.normal(kx, (B, 1), dtype=jnp.float32)
    params = init_params(kp)
    ref_log_pi, ref_v = reference_forward(x, params)

    # f32 MXU-operand path: bitwise-close to the pure-JAX reference.
    packed_f32 = pack_params(params, compute_dtype=jnp.float32)
    log_pi, v = chessnet_forward(x, packed_f32)
    jax.block_until_ready((log_pi, v))
    assert log_pi.shape == (B, ACTION_SIZE) and v.shape == (B, 1)
    assert jnp.allclose(log_pi, ref_log_pi, atol=1e-5, rtol=1e-5)
    assert jnp.allclose(v, ref_v, atol=1e-5, rtol=1e-5)

    # Default bf16 MXU-operand path (recommended on v6e/v7x): tolerance-checked
    # against the f32 reference, not just finiteness.
    packed_bf16 = pack_params(params)
    log_pi_bf, v_bf = chessnet_forward(x, packed_bf16)
    jax.block_until_ready((log_pi_bf, v_bf))
    assert jnp.allclose(log_pi_bf, ref_log_pi, atol=5e-2, rtol=5e-2)
    assert jnp.allclose(v_bf, ref_v, atol=5e-2, rtol=5e-2)

    # Multi-step grid (>=2 "parallel" steps -> both v7x TCs) via the packed-slab
    # API, with a bf16 slab to halve the output writeback.
    B2 = 64
    x2 = jax.random.normal(kx, (B2, 1), dtype=jnp.float32)
    slab = chessnet_forward_packed(x2, packed_bf16, out_dtype=jnp.bfloat16)
    jax.block_until_ready(slab)
    assert slab.shape[0] >= B2 and slab.shape[1] == OUT_LANES
    assert bool(jnp.all(jnp.isfinite(
        slab[:B2, :ACTION_SIZE + 1].astype(jnp.float32))))

    print("KERNEL_OK")
</pallas_src>

<mosaic_0001>
module attributes {stable_mosaic.version = 11 : i64} {
  func.func @chessnet_kernel(%arg0: i32, %arg1: memref<8x1xf32, #tpu.memory_space<vmem>>, %arg2: memref<1x64xf32, #tpu.memory_space<vmem>>, %arg3: memref<1x64xf32, #tpu.memory_space<vmem>>, %arg4: memref<64x64xf32, #tpu.memory_space<vmem>>, %arg5: memref<1x64xf32, #tpu.memory_space<vmem>>, %arg6: memref<64x128xf32, #tpu.memory_space<vmem>>, %arg7: memref<1x128xf32, #tpu.memory_space<vmem>>, %arg8: memref<8x128xf32, #tpu.memory_space<vmem>>) attributes {dimension_semantics = [#tpu.dimension_semantics<parallel>], iteration_bounds = array<i64: 1>, scalar_prefetch = 0 : i64, scratch_operands = 0 : i64, tpu.core_type = #tpu.core_type<tc>, window_params = [{transform_indices = @transform_0, window_bounds = array<i64: 8, 1>}, {pipeline_mode = #tpu.pipeline_mode<synchronous>, transform_indices = @transform_1, window_bounds = array<i64: 1, 64>}, {pipeline_mode = #tpu.pipeline_mode<synchronous>, transform_indices = @transform_2, window_bounds = array<i64: 1, 64>}, {pipeline_mode = #tpu.pipeline_mode<synchronous>, transform_indices = @transform_3, window_bounds = array<i64: 64, 64>}, {pipeline_mode = #tpu.pipeline_mode<synchronous>, transform_indices = @transform_4, window_bounds = array<i64: 1, 64>}, {pipeline_mode = #tpu.pipeline_mode<synchronous>, transform_indices = @transform_5, window_bounds = array<i64: 64, 128>}, {pipeline_mode = #tpu.pipeline_mode<synchronous>, transform_indices = @transform_6, window_bounds = array<i64: 1, 128>}, {transform_indices = @transform_7, window_bounds = array<i64: 8, 128>}]} {
    %c0 = arith.constant 0 : index
    %c0_0 = arith.constant 0 : index
    %0 = vector.load %arg1[%c0, %c0_0] : memref<8x1xf32, #tpu.memory_space<vmem>>, vector<8x1xf32>
    %c0_1 = arith.constant 0 : index
    %c0_2 = arith.constant 0 : index
    %1 = vector.load %arg2[%c0_1, %c0_2] : memref<1x64xf32, #tpu.memory_space<vmem>>, vector<1x64xf32>
    %2 = vector.broadcast %0 : vector<8x1xf32> to vector<8x64xf32>
    %3 = vector.broadcast %1 : vector<1x64xf32> to vector<8x64xf32>
    %4 = arith.mulf %2, %3 : vector<8x64xf32>
    %c0_3 = arith.constant 0 : index
    %c0_4 = arith.constant 0 : index
    %5 = vector.load %arg3[%c0_3, %c0_4] : memref<1x64xf32, #tpu.memory_space<vmem>>, vector<1x64xf32>
    %6 = vector.broadcast %5 : vector<1x64xf32> to vector<8x64xf32>
    %7 = arith.addf %4, %6 : vector<8x64xf32>
    %cst = arith.constant 0.000000e+00 : f32
    %8 = vector.broadcast %cst : f32 to vector<8x64xf32>
    %9 = arith.maximumf %7, %8 : vector<8x64xf32>
    %c0_5 = arith.constant 0 : index
    %c0_6 = arith.constant 0 : index
    %10 = vector.load %arg4[%c0_5, %c0_6] : memref<64x64xf32, #tpu.memory_space<vmem>>, vector<64x64xf32>
    %cst_7 = arith.constant dense<0.000000e+00> : vector<8x64xf32>
    %11 = tpu.matmul %9, %10, %cst_7 {dimension_numbers = #tpu.dot_dimension_numbers<[1], [0], [0], [1], [0, 0, 1, 1], [], []>} : vector<8x64xf32>, vector<64x64xf32>, vector<8x64xf32> -> vector<8x64xf32>
    %c0_8 = arith.constant 0 : index
    %c0_9 = arith.constant 0 : index
    %12 = vector.load %arg5[%c0_8, %c0_9] : memref<1x64xf32, #tpu.memory_space<vmem>>, vector<1x64xf32>
    %13 = vector.broadcast %12 : vector<1x64xf32> to vector<8x64xf32>
    %14 = arith.addf %11, %13 : vector<8x64xf32>
    %cst_10 = arith.constant 0.000000e+00 : f32
    %15 = vector.broadcast %cst_10 : f32 to vector<8x64xf32>
    %16 = arith.maximumf %14, %15 : vector<8x64xf32>
    %c0_11 = arith.constant 0 : index
    %c0_12 = arith.constant 0 : index
    %17 = vector.load %arg6[%c0_11, %c0_12] : memref<64x128xf32, #tpu.memory_space<vmem>>, vector<64x128xf32>
    %cst_13 = arith.constant dense<0.000000e+00> : vector<8x128xf32>
    %18 = tpu.matmul %16, %17, %cst_13 {dimension_numbers = #tpu.dot_dimension_numbers<[1], [0], [0], [1], [0, 0, 1, 1], [], []>} : vector<8x64xf32>, vector<64x128xf32>, vector<8x128xf32> -> vector<8x128xf32>
    %c0_14 = arith.constant 0 : index
    %c0_15 = arith.constant 0 : index
    %19 = vector.load %arg7[%c0_14, %c0_15] : memref<1x128xf32, #tpu.memory_space<vmem>>, vector<1x128xf32>
    %20 = vector.broadcast %19 : vector<1x128xf32> to vector<8x128xf32>
    %21 = arith.addf %18, %20 : vector<8x128xf32>
    %22 = tpu.iota {dimensions = array<i32: 1>} : vector<8x128xi32>
    %c20_i32 = arith.constant 20 : i32
    %23 = vector.broadcast %c20_i32 : i32 to vector<8x128xi32>
    %24 = arith.cmpi eq, %22, %23 : vector<8x128xi32>
    %cst_16 = arith.constant -1.000000e+30 : f32
    %25 = vector.broadcast %cst_16 : f32 to vector<8x128xf32>
    %26 = arith.select %24, %25, %21 : vector<8x128xi1>, vector<8x128xf32>
    %cst_17 = arith.constant dense<0xFF800000> : vector<8xf32>
    %27 = vector.multi_reduction <maximumf>, %26, %cst_17 [1] : vector<8x128xf32> to vector<8xf32>
    %28 = vector.shape_cast %27 : vector<8xf32> to vector<8x1xf32>
    %29 = vector.broadcast %28 : vector<8x1xf32> to vector<8x128xf32>
    %30 = arith.subf %26, %29 : vector<8x128xf32>
    %31 = math.exp %30 : vector<8x128xf32>
    %cst_18 = arith.constant dense<0.000000e+00> : vector<8xf32>
    %32 = vector.multi_reduction <add>, %31, %cst_18 [1] : vector<8x128xf32> to vector<8xf32>
    %33 = vector.shape_cast %32 : vector<8xf32> to vector<8x1xf32>
    %34 = math.log %33 : vector<8x1xf32>
    %35 = arith.addf %28, %34 : vector<8x1xf32>
    %36 = vector.broadcast %35 : vector<8x1xf32> to vector<8x128xf32>
    %37 = arith.subf %21, %36 : vector<8x128xf32>
    %38 = math.tanh %21 : vector<8x128xf32>
    %39 = arith.select %24, %38, %37 : vector<8x128xi1>, vector<8x128xf32>
    %c0_19 = arith.constant 0 : index
    %c0_20 = arith.constant 0 : index
    %40 = vector.load %arg8[%c0_19, %c0_20] : memref<8x128xf32, #tpu.memory_space<vmem>>, vector<8x128xf32>
    tpu.vector_store %arg8[%c0_19, %c0_20], %39 {strides = array<i32>} : memref<8x128xf32, #tpu.memory_space<vmem>>, vector<8x128xf32>,
    return
  }
  func.func @transform_0(%arg0: i32) -> (i32, i32) {
    %c0_i32 = arith.constant 0 : i32
    %c0_i32_0 = arith.constant 0 : i32
    return %arg0, %c0_i32 : i32, i32
  }
  func.func @transform_1(%arg0: i32) -> (i32, i32) {
    %c0_i32 = arith.constant 0 : i32
    %c0_i32_0 = arith.constant 0 : i32
    %c0_i32_1 = arith.constant 0 : i32
    return %c0_i32, %c0_i32_0 : i32, i32
  }
  func.func @transform_2(%arg0: i32) -> (i32, i32) {
    %c0_i32 = arith.constant 0 : i32
    %c0_i32_0 = arith.constant 0 : i32
    %c0_i32_1 = arith.constant 0 : i32
    return %c0_i32, %c0_i32_0 : i32, i32
  }
  func.func @transform_3(%arg0: i32) -> (i32, i32) {
    %c0_i32 = arith.constant 0 : i32
    %c0_i32_0 = arith.constant 0 : i32
    %c0_i32_1 = arith.constant 0 : i32
    return %c0_i32, %c0_i32_0 : i32, i32
  }
  func.func @transform_4(%arg0: i32) -> (i32, i32) {
    %c0_i32 = arith.constant 0 : i32
    %c0_i32_0 = arith.constant 0 : i32
    %c0_i32_1 = arith.constant 0 : i32
    return %c0_i32, %c0_i32_0 : i32, i32
  }
  func.func @transform_5(%arg0: i32) -> (i32, i32) {
    %c0_i32 = arith.constant 0 : i32
    %c0_i32_0 = arith.constant 0 : i32
    %c0_i32_1 = arith.constant 0 : i32
    return %c0_i32, %c0_i32_0 : i32, i32
  }
  func.func @transform_6(%arg0: i32) -> (i32, i32) {
    %c0_i32 = arith.constant 0 : i32
    %c0_i32_0 = arith.constant 0 : i32
    %c0_i32_1 = arith.constant 0 : i32
    return %c0_i32, %c0_i32_0 : i32, i32
  }
  func.func @transform_7(%arg0: i32) -> (i32, i32) {
    %c0_i32 = arith.constant 0 : i32
    %c0_i32_0 = arith.constant 0 : i32
    return %arg0, %c0_i32 : i32, i32
  }
}

</mosaic_0001>

<llo_original>
// kernel: chessnet_forward_packed.1
$region0: #{chessnet_forward_packed.1}
  #allocation0 [shape = 'u32[]', space=smem, size = 0x4, offset = 0x4, fixed_abs, tag = 'smem constant byte address 0x4 - core index']
  #allocation1 [shape = 'u32[144,128]{1,0:T(1,128)}', space=vmem, size = 0x12000, scoped, tag = 'internal scratch']
  %s0 = inlined_call_operand.vmem [shape: f32[8,1], index: 0, kind: input, shape index: {}]
  %s1 = inlined_call_operand.vmem [shape: f32[1,64], index: 1, kind: input, shape index: {}]
  %s2 = inlined_call_operand.vmem [shape: f32[1,64], index: 2, kind: input, shape index: {}]
  %s3 = inlined_call_operand.hbm [shape: f32[64,64], index: 3, kind: input, shape index: {}]
  %s4 = inlined_call_operand.vmem [shape: f32[1,64], index: 4, kind: input, shape index: {}]
  %s5 = inlined_call_operand.hbm [shape: f32[64,128], index: 5, kind: input, shape index: {}]
  %s6 = inlined_call_operand.vmem [shape: f32[1,128], index: 6, kind: input, shape index: {}]
  %s7 = inlined_call_operand.hbm [shape: f32[8,128], index: 7, kind: output, shape index: {}]
  %s8 = sld [smem:[#allocation0]]
  $region46: #{chessnet_forward_packed.1} parent=0
    _
  %s10 = ssub.s32 1, %s8
  %s11 = scalar_select 0, %s10, %s8
  $region1: #{chessnet_forward_packed.1} parent=0
    #allocation2 [shape = 'u8[32768]{0}', space=vmem, size = 0x8000, scoped, tag = 'input window, operand 3, single buffered']
    #allocation3 [shape = 's32[1]{0}', space=sflag, size = 0x4, scoped, tag = 'scoped memory for chessnet_forward_packed.1']
    #allocation4 [shape = 's32[1]{0}', space=sflag, size = 0x4, scoped, tag = 'scoped memory for chessnet_forward_packed.1']
    #allocation5 [shape = 'u8[32768]{0}', space=vmem, size = 0x8000, scoped, tag = 'input window, operand 5, single buffered']
    #allocation6 [shape = 's32[1]{0}', space=sflag, size = 0x4, scoped, tag = 'scoped memory for chessnet_forward_packed.1']
    #allocation7 [shape = 'u8[4096]{0}', space=vmem, size = 0x1000, scoped, tag = 'output window, operand 0, single buffered']
    %12 = vsyncpa [#allocation3], 0
    %13 = vsyncpa [#allocation6], 0
    %14 = vsyncpa [#allocation4], 0
    // Predicated region
    $region2: #{chessnet_forward_packed.1} parent=1 // pred_check
      _
    $region3: #{chessnet_forward_packed.1} parent=1 // pred_check_branch
      %16 = sbr.rel (0) target = $region5
    $region4: #{chessnet_forward_packed.1} parent=1 // pred_region
      _
    $region5: #{chessnet_forward_packed.1} parent=1 // pred_fallthru
      _
    // Predicated region
    $region6: #{chessnet_forward_packed.1} parent=1 // pred_check
      _
    $region7: #{chessnet_forward_packed.1} parent=1 // pred_check_branch
      %18 = sbr.rel (0) target = $region9
    $region8: #{chessnet_forward_packed.1} parent=1 // pred_region
      _
    $region9: #{chessnet_forward_packed.1} parent=1 // pred_fallthru
      _
    // Predicated region
    $region10: #{chessnet_forward_packed.1} parent=1 // pred_check
      _
    $region11: #{chessnet_forward_packed.1} parent=1 // pred_check_branch
      %20 = sbr.rel (0) target = $region13
    $region12: #{chessnet_forward_packed.1} parent=1 // pred_region
      _
    $region13: #{chessnet_forward_packed.1} parent=1 // pred_fallthru
      _
    // Predicated region
    $region14: #{chessnet_forward_packed.1} parent=1 // pred_check
      _
    $region15: #{chessnet_forward_packed.1} parent=1 // pred_check_branch
      %22 = sbr.rel (0) target = $region17
    $region16: #{chessnet_forward_packed.1} parent=1 // pred_region
      %s24 = ssub.s32 1024, 1024
      %25 = vsyncadd [#allocation3], %s24
      %s26 = sshll.u32 [#allocation2], 4
      %s27 = int_to_ptr.vmem [resolvable:$true] %s26
      %32 = dma.hbm_to_vmem [thread:$0]  %s3, 1024, %s27, [#allocation3], 128, 128, 8
    $region17: #{chessnet_forward_packed.1} parent=1 // pred_fallthru
      _
    // Predicated region
    $region18: #{chessnet_forward_packed.1} parent=1 // pred_check
      _
    $region19: #{chessnet_forward_packed.1} parent=1 // pred_check_branch
      %34 = sbr.rel (0) target = $region21
    $region20: #{chessnet_forward_packed.1} parent=1 // pred_region
      _
    $region21: #{chessnet_forward_packed.1} parent=1 // pred_fallthru
      _
    // Predicated region
    $region22: #{chessnet_forward_packed.1} parent=1 // pred_check
      _
    $region23: #{chessnet_forward_packed.1} parent=1 // pred_check_branch
      %36 = sbr.rel (0) target = $region25
    $region24: #{chessnet_forward_packed.1} parent=1 // pred_region
      %s38 = ssub.s32 1024, 1024
      %39 = vsyncadd [#allocation6], %s38
      %s40 = sshll.u32 [#allocation5], 4
      %s41 = int_to_ptr.vmem [resolvable:$true] %s40
      %46 = dma.hbm_to_vmem [thread:$0]  %s5, 1024, %s41, [#allocation6], 128, 128, 8
    $region25: #{chessnet_forward_packed.1} parent=1 // pred_fallthru
      _
    // Predicated region
    $region26: #{chessnet_forward_packed.1} parent=1 // pred_check
      _
    $region27: #{chessnet_forward_packed.1} parent=1 // pred_check_branch
      %48 = sbr.rel (0) target = $region29
    $region28: #{chessnet_forward_packed.1} parent=1 // pred_region
      _
    $region29: #{chessnet_forward_packed.1} parent=1 // pred_fallthru
      _
    // Predicated region
    $region30: #{chessnet_forward_packed.1} parent=1 // pred_check
      _
    $region31: #{chessnet_forward_packed.1} parent=1 // pred_check_branch
      %50 = sbr.rel (0) target = $region33
    $region32: #{chessnet_forward_packed.1} parent=1 // pred_region
      %51 = dma.done [#allocation3], 1024
    $region33: #{chessnet_forward_packed.1} parent=1 // pred_fallthru
      _
    // Predicated region
    $region34: #{chessnet_forward_packed.1} parent=1 // pred_check
      _
    $region35: #{chessnet_forward_packed.1} parent=1 // pred_check_branch
      %53 = sbr.rel (0) target = $region37
    $region36: #{chessnet_forward_packed.1} parent=1 // pred_region
      %54 = dma.done [#allocation6], 1024
    $region37: #{chessnet_forward_packed.1} parent=1 // pred_fallthru
      _
    %v55 = vld [vmem:[%s0] sm:$0xff]
    %v56 = vld [vmem:[%s1] sm:$0x1]
    %58 = vset.pattern.permute.xlu0 0
    %59 = vperm.xlu0 %58, %v55
    %v60 = vpop.permute.xlu0 %59
    %v63 = vlaneseq
    %v64 = vshrl.u32 %v63, 7
    %v65 = vsub.s32 0, %v64
    %v66 = vrot.slane %v56, %v65
    %v68 = vmul.f32 %v60, %v66
    %v69 = vld [vmem:[%s2] sm:$0x1]
    %v71 = vlaneseq
    %v72 = vshrl.u32 %v71, 7
    %v73 = vsub.s32 0, %v72
    %v74 = vrot.slane %v69, %v73
    %v76 = vadd.f32 %v68, %v74
    %v77 = vmax.f32 %v76, 0.0
    %v78 = vld [vmem:[#allocation2] sm:$0xff]
    %v79 = vld [vmem:[#allocation2 + $0x8] sm:$0xff]
    %v80 = vld [vmem:[#allocation2 + $0x10] sm:$0xff]
    %v81 = vld [vmem:[#allocation2 + $0x18] sm:$0xff]
    %v82 = vld [vmem:[#allocation2 + $0x20] sm:$0xff]
    %v83 = vld [vmem:[#allocation2 + $0x28] sm:$0xff]
    %v84 = vld [vmem:[#allocation2 + $0x30] sm:$0xff]
    %v85 = vld [vmem:[#allocation2 + $0x38] sm:$0xff]
    %v86 = vld [vmem:[%s4] sm:$0x1]
    %v88 = vlaneseq
    %v89 = vshrl.u32 %v88, 7
    %v90 = vsub.s32 0, %v89
    %v91 = vrot.slane %v86, %v90
    %vm93 = vcmask 523264
    %v95 = vsel %vm93, %v77, 0
    %97 = vmatprep.subr.mxu0 0.0
    %98 = vmatpush1.msra.mxu0 0.0
    %99 = vmatprep.subr.mxu0 0.0
    %100 = vmatpush1.msra.mxu0 0.0
    %101 = vmatprep.subr.mxu0 0.0
    %102 = vmatpush1.msra.mxu0 0.0
    %103 = vmatprep.subr.mxu0 0.0
    %104 = vmatpush1.msra.mxu0 0.0
    %105 = vmatprep.subr.mxu0 0.0
    %106 = vmatpush1.msra.mxu0 0.0
    %107 = vmatprep.subr.mxu0 0.0
    %108 = vmatpush1.msra.mxu0 0.0
    %109 = vmatprep.subr.mxu0 0.0
    %110 = vmatpush1.msra.mxu0 0.0
    %111 = vmatprep.subr.mxu0 0.0
    %112 = vmatpush1.msra.mxu0 0.0
    %113 = vmatprep.subr.mxu0 0.0
    %114 = vmatpush1.msra.mxu0 %v85
    %115 = vmatprep.subr.mxu0 0.0
    %116 = vmatpush1.msra.mxu0 %v84
    %117 = vmatprep.subr.mxu0 0.0
    %118 = vmatpush1.msra.mxu0 %v83
    %119 = vmatprep.subr.mxu0 0.0
    %120 = vmatpush1.msra.mxu0 %v82
    %121 = vmatprep.subr.mxu0 0.0
    %122 = vmatpush1.msra.mxu0 %v81
    %123 = vmatprep.subr.mxu0 0.0
    %124 = vmatpush1.msra.mxu0 %v80
    %125 = vmatprep.subr.mxu0 0.0
    %126 = vmatpush1.msra.mxu0 %v79
    %127 = vmatprep.subr.mxu0 0.0
    %128 = vmatpush1.msra.mxu0 %v78
    %129 = vmatprep.subr.mxu0 0.0
    %130 = vmatpush2.msra.mxu0 0.0
    %131 = vmatprep.subr.mxu0 0.0
    %132 = vmatpush2.msra.mxu0 0.0
    %133 = vmatprep.subr.mxu0 0.0
    %134 = vmatpush2.msra.mxu0 0.0
    %135 = vmatprep.subr.mxu0 0.0
    %136 = vmatpush2.msra.mxu0 0.0
    %137 = vmatprep.subr.mxu0 0.0
    %138 = vmatpush2.msra.mxu0 0.0
    %139 = vmatprep.subr.mxu0 0.0
    %140 = vmatpush2.msra.mxu0 0.0
    %141 = vmatprep.subr.mxu0 0.0
    %142 = vmatpush2.msra.mxu0 0.0
    %143 = vmatprep.subr.mxu0 0.0
    %144 = vmatpush2.msra.mxu0 0.0
    %145 = vmatprep.subr.mxu0 0.0
    %146 = vmatpush2.msra.mxu0 0.0
    %147 = vmatprep.subr.mxu0 0.0
    %148 = vmatpush2.msra.mxu0 0.0
    %149 = vmatprep.subr.mxu0 0.0
    %150 = vmatpush2.msra.mxu0 0.0
    %151 = vmatprep.subr.mxu0 0.0
    %152 = vmatpush2.msra.mxu0 0.0
    %153 = vmatprep.subr.mxu0 0.0
    %154 = vmatpush2.msra.mxu0 0.0
    %155 = vmatprep.subr.mxu0 0.0
    %156 = vmatpush2.msra.mxu0 0.0
    %157 = vmatprep.subr.mxu0 0.0
    %158 = vmatpush2.msra.mxu0 0.0
    %159 = vmatprep.subr.mxu0 0.0
    %160 = vmatpush2.msra.mxu0 0.0
    %161 = vmatprep.mubr.f32.mxu0 0.0
    %162 = vmatmul.mubr.f32.gmra.mxu0 %v95
    %v163 = vpop.f32.mrf.mxu0
    %v164 = vadd.f32 %v91, %v163
    %v165 = vpop.f32.mrf.mxu0
    %166 = vdwg.mxu0
    %v167 = vmax.f32 %v164, 0.0
    %v168 = vld [vmem:[#allocation5] sm:$0xff]
    %v169 = vld [vmem:[#allocation5 + $0x8] sm:$0xff]
    %v170 = vld [vmem:[#allocation5 + $0x10] sm:$0xff]
    %v171 = vld [vmem:[#allocation5 + $0x18] sm:$0xff]
    %v172 = vld [vmem:[#allocation5 + $0x20] sm:$0xff]
    %v173 = vld [vmem:[#allocation5 + $0x28] sm:$0xff]
    %v174 = vld [vmem:[#allocation5 + $0x30] sm:$0xff]
    %v175 = vld [vmem:[#allocation5 + $0x38] sm:$0xff]
    %v176 = vld [vmem:[%s6] sm:$0x1]
    %v178 = vlaneseq
    %v179 = vshrl.u32 %v178, 7
    %v180 = vsub.s32 0, %v179
    %v181 = vrot.slane %v176, %v180
    %v184 = vsel %vm93, %v167, 0
    %186 = vmatprep.subr.mxu0 0.0
    %187 = vmatpush1.msra.mxu0 0.0
    %188 = vmatprep.subr.mxu0 0.0
    %189 = vmatpush1.msra.mxu0 0.0
    %190 = vmatprep.subr.mxu0 0.0
    %191 = vmatpush1.msra.mxu0 0.0
    %192 = vmatprep.subr.mxu0 0.0
    %193 = vmatpush1.msra.mxu0 0.0
    %194 = vmatprep.subr.mxu0 0.0
    %195 = vmatpush1.msra.mxu0 0.0
    %196 = vmatprep.subr.mxu0 0.0
    %197 = vmatpush1.msra.mxu0 0.0
    %198 = vmatprep.subr.mxu0 0.0
    %199 = vmatpush1.msra.mxu0 0.0
    %200 = vmatprep.subr.mxu0 0.0
    %201 = vmatpush1.msra.mxu0 0.0
    %202 = vmatprep.subr.mxu0 0.0
    %203 = vmatpush1.msra.mxu0 %v175
    %204 = vmatprep.subr.mxu0 0.0
    %205 = vmatpush1.msra.mxu0 %v174
    %206 = vmatprep.subr.mxu0 0.0
    %207 = vmatpush1.msra.mxu0 %v173
    %208 = vmatprep.subr.mxu0 0.0
    %209 = vmatpush1.msra.mxu0 %v172
    %210 = vmatprep.subr.mxu0 0.0
    %211 = vmatpush1.msra.mxu0 %v171
    %212 = vmatprep.subr.mxu0 0.0
    %213 = vmatpush1.msra.mxu0 %v170
    %214 = vmatprep.subr.mxu0 0.0
    %215 = vmatpush1.msra.mxu0 %v169
    %216 = vmatprep.subr.mxu0 0.0
    %217 = vmatpush1.msra.mxu0 %v168
    %218 = vmatprep.subr.mxu0 0.0
    %219 = vmatpush2.msra.mxu0 0.0
    %220 = vmatprep.subr.mxu0 0.0
    %221 = vmatpush2.msra.mxu0 0.0
    %222 = vmatprep.subr.mxu0 0.0
    %223 = vmatpush2.msra.mxu0 0.0
    %224 = vmatprep.subr.mxu0 0.0
    %225 = vmatpush2.msra.mxu0 0.0
    %226 = vmatprep.subr.mxu0 0.0
    %227 = vmatpush2.msra.mxu0 0.0
    %228 = vmatprep.subr.mxu0 0.0
    %229 = vmatpush2.msra.mxu0 0.0
    %230 = vmatprep.subr.mxu0 0.0
    %231 = vmatpush2.msra.mxu0 0.0
    %232 = vmatprep.subr.mxu0 0.0
    %233 = vmatpush2.msra.mxu0 0.0
    %234 = vmatprep.subr.mxu0 0.0
    %235 = vmatpush2.msra.mxu0 0.0
    %236 = vmatprep.subr.mxu0 0.0
    %237 = vmatpush2.msra.mxu0 0.0
    %238 = vmatprep.subr.mxu0 0.0
    %239 = vmatpush2.msra.mxu0 0.0
    %240 = vmatprep.subr.mxu0 0.0
    %241 = vmatpush2.msra.mxu0 0.0
    %242 = vmatprep.subr.mxu0 0.0
    %243 = vmatpush2.msra.mxu0 0.0
    %244 = vmatprep.subr.mxu0 0.0
    %245 = vmatpush2.msra.mxu0 0.0
    %246 = vmatprep.subr.mxu0 0.0
    %247 = vmatpush2.msra.mxu0 0.0
    %248 = vmatprep.subr.mxu0 0.0
    %249 = vmatpush2.msra.mxu0 0.0
    %250 = vmatprep.mubr.f32.mxu0 0.0
    %251 = vmatmul.mubr.f32.gmra.mxu0 %v184
    %v252 = vpop.f32.mrf.mxu0
    %v253 = vadd.f32 %v181, %v252
    %v254 = vpop.f32.mrf.mxu0
    %255 = vdwg.mxu0
    %v256 = vlaneseq
    %v257 = vand.u32 %v256, 127
    %vm258 = vcmp.eq.s32.totalorder %v257, 20
    %v259 = vsel %vm258, -1e+30, %v253
    %260 = vmax.xlane.f32.xlu0 %v259
    %v261 = vpop.xlane.xlu0 %260
    %v262 = vsub.f32 %v259, %v261
    %v263 = vmul.f32 %v262, 1.442695
    %v264 = vpow.pop %v263
    %265 = vadd.xlane.f32.xlu0 %v264
    %v266 = vpop.xlane.xlu0 %265
    %v267 = vlog2.pop %v266
    %v268 = vmul.f32 %v267, 0.6931472
    %v269 = vadd.f32 %v261, %v268
    %v270 = vsub.f32 %v253, %v269
    %v271 = vtanh.pop %v253
    %v272 = vsel %vm258, %v271, %v270
    %273 = vst [vmem:[#allocation7] sm:$0xff] %v272
    // Predicated region
    $region38: #{chessnet_forward_packed.1} parent=1 // pred_check
      _
    $region39: #{chessnet_forward_packed.1} parent=1 // pred_check_branch
      %275 = sbr.rel (0) target = $region41
    $region40: #{chessnet_forward_packed.1} parent=1 // pred_region
      %s277 = ssub.s32 128, 128
      %278 = vsyncadd [#allocation4], %s277
      %s280 = sshll.u32 [#allocation7], 4
      %s281 = int_to_ptr.vmem [resolvable:$true] %s280
      %283 = dma.vmem_to_hbm [thread:$0]  %s281, 128, %s7, [#allocation4]
    $region41: #{chessnet_forward_packed.1} parent=1 // pred_fallthru
      _
    // Predicated region
    $region42: #{chessnet_forward_packed.1} parent=1 // pred_check
      _
    $region43: #{chessnet_forward_packed.1} parent=1 // pred_check_branch
      %285 = sbr.rel (0) target = $region45
    $region44: #{chessnet_forward_packed.1} parent=1 // pred_region
      %286 = dma.done [#allocation4], 128
    $region45: #{chessnet_forward_packed.1} parent=1 // pred_fallthru
      _
    %287 = vsyncpa [#allocation3], 1
    %288 = vsyncpa [#allocation6], 1
    %289 = vsyncpa [#allocation4], 1

</llo_original>
